<compile_context>
chip_gen: v7x
topology: tpu7x:2x2x1
jax: 0.10.0
libtpu: 0.0.40
codegen_flags: <defaults>
</compile_context>

<pallas_src>
import jax
import jax.numpy as jnp
from jax import lax
from jax.experimental import pallas as pl
from jax.experimental.pallas import tpu as pltpu


def _round_up(v, m):
    return ((v + m - 1) // m) * m


def _cdiv(a, b):
    return -(-a // b)


def _make_poly3_kernel(*, chunk_rows, num_chunks, red_axis):
    """Kernel factory (static chunking / grid layout baked in via closure)."""

    def kernel(coef_ref, x_ref, y_ref, out_ref, acc_ref):
        # coef_ref: SMEM (4,)              -> [a, b, c, d] loop-invariant scalars
        # x_ref/y_ref: VMEM (tile_rows,128) tiles of the flattened input
        # out_ref: VMEM (1,1) (or (1,1,1) per core-part) scalar loss output
        # acc_ref: VMEM (8,128) scratch partial-sum accumulator (persists
        #          across grid steps of the reduction axis)
        i = pl.program_id(red_axis)

        # Scalar coefficients read once from SMEM, hoisted above vector math.
        a = coef_ref[0]
        b = coef_ref[1]
        c = coef_ref[2]
        d = coef_ref[3]

        @pl.when(i == 0)
        def _init():
            acc_ref[...] = jnp.zeros_like(acc_ref)

        def _tile_partial(xv, yv):
            # y_pred = a + b*x + c*x^2 + d*x^3 (Horner, pure VPU)
            y_pred = a + xv * (b + xv * (c + xv * d))
            diff = y_pred - yv
            sq = diff * diff
            # Fold (rows,128) down to a vreg-shaped (8,128) partial with
            # element-wise adds only (no cross-lane XLU work per step).
            return sq.reshape(sq.shape[0] // 8, 8, 128).sum(axis=0)

        if num_chunks == 1:
            part = _tile_partial(x_ref[...], y_ref[...])
        else:
            def chunk_body(k, carry):
                r = pl.multiple_of(k * chunk_rows, chunk_rows)
                xv = x_ref[pl.ds(r, chunk_rows), :]
                yv = y_ref[pl.ds(r, chunk_rows), :]
                return carry + _tile_partial(xv, yv)

            part = lax.fori_loop(0, num_chunks, chunk_body,
                                 jnp.zeros((8, 128), jnp.float32))

        acc_ref[...] += part

        # Finalize: one-time cross-lane/sublane reduce, write scalar result.
        @pl.when(i == pl.num_programs(red_axis) - 1)
        def _finalize():
            tot = jnp.sum(acc_ref[...], axis=1, keepdims=True)   # (8, 1)
            tot = jnp.sum(tot, axis=0, keepdims=True)            # (1, 1)
            out_ref[...] = tot.reshape(out_ref.shape)

    return kernel


def polynomial3_loss(coefs, x, y, *, max_tile_rows=8192, chunk_rows=512,
                     num_cores=1):
    """Sum-of-squared-errors of the cubic fit, as a single Pallas kernel.

    coefs:      (4,) float32 [a, b, c, d]
    x, y:       arrays of matching shape (flattened internally); any length N.
    num_cores:  set to 2 on v7x to shard the streaming reduction across both
                TensorCores via CORE_PARALLEL (only engaged for large N).
    """
    coefs = jnp.asarray(coefs, jnp.float32)
    xf = jnp.ravel(x).astype(jnp.float32)
    yf = jnp.ravel(y).astype(jnp.float32)
    assert xf.shape == yf.shape
    n = xf.shape[0]

    lane = 128
    # Minimum rows (multiple of 8 sublanes) to hold N elements.
    rows_min = _round_up(_cdiv(n, lane), 8)

    # Chunk / tile sizing (all multiples of 8 rows).
    chunk = max(8, (chunk_rows // 8) * 8)
    tile_rows = max(8, (min(max_tile_rows, rows_min) // 8) * 8)
    if tile_rows > chunk:
        tile_rows = max(chunk, (tile_rows // chunk) * chunk)  # chunk-aligned
        chunk_per_tile = chunk
    else:
        chunk_per_tile = tile_rows
    num_chunks = tile_rows // chunk_per_tile

    num_blocks = _cdiv(rows_min, tile_rows)

    # Optional 2-TC split (v7x): only when each core gets several MiB of work.
    bytes_per_array = rows_min * lane * 4
    split = (num_cores > 1
             and num_blocks >= 2 * num_cores
             and bytes_per_array >= (num_cores * 4) << 20)
    num_parts = num_cores if split else 1
    blocks_per_part = _cdiv(num_blocks, num_parts)
    num_blocks = blocks_per_part * num_parts

    rows_padded = num_blocks * tile_rows
    n_padded = rows_padded * lane
    pad = n_padded - n
    if pad:
        # Pad x with 0 and y with a (= coefs[0]) so padded elements give
        # y_pred - y == a - a == 0  -> zero contribution to the loss.
        xf = jnp.concatenate([xf, jnp.zeros((pad,), jnp.float32)])
        yf = jnp.concatenate([yf, jnp.full((pad,), coefs[0], jnp.float32)])
    x2 = xf.reshape(rows_padded, lane)
    y2 = yf.reshape(rows_padded, lane)

    if num_parts == 1:
        grid = (num_blocks,)
        red_axis = 0
        in_specs = [
            pl.BlockSpec(memory_space=pltpu.MemorySpace.SMEM),          # coefs
            pl.BlockSpec((tile_rows, lane), lambda i: (i, 0)),          # x tile
            pl.BlockSpec((tile_rows, lane), lambda i: (i, 0)),          # y tile
        ]
        out_shape = jax.ShapeDtypeStruct((1, 1), jnp.float32)
        out_specs = pl.BlockSpec((1, 1), lambda i: (0, 0))
        dims = ("arbitrary",)
    else:
        bpp = blocks_per_part
        grid = (num_parts, bpp)
        red_axis = 1
        in_specs = [
            pl.BlockSpec(memory_space=pltpu.MemorySpace.SMEM),
            pl.BlockSpec((tile_rows, lane), lambda p, i: (p * bpp + i, 0)),
            pl.BlockSpec((tile_rows, lane), lambda p, i: (p * bpp + i, 0)),
        ]
        out_shape = jax.ShapeDtypeStruct((num_parts, 1, 1), jnp.float32)
        out_specs = pl.BlockSpec((1, 1, 1), lambda p, i: (p, 0, 0))
        # CORE_PARALLEL genuinely shards the leading axis across TensorCores
        # (v7x); plain "parallel" does not.
        dims = (pltpu.CORE_PARALLEL, pltpu.ARBITRARY)

    kernel = _make_poly3_kernel(chunk_rows=chunk_per_tile,
                                num_chunks=num_chunks,
                                red_axis=red_axis)

    out = pl.pallas_call(
        kernel,
        out_shape=out_shape,
        grid_spec=pltpu.PrefetchScalarGridSpec(
            num_scalar_prefetch=0,
            grid=grid,
            in_specs=in_specs,
            out_specs=out_specs,
            scratch_shapes=[pltpu.VMEM((8, lane), jnp.float32)],
        ),
        compiler_params=pltpu.CompilerParams(
            dimension_semantics=dims,
            # 2 inputs x 2 pipeline buffers x 4 MiB (8192-row tiles) = 16 MiB,
            # plus chunk intermediates/scratch; 32 MiB clears v5e's 16 MiB
            # scoped default and fits v7x's 64 MiB physical VMEM.
            vmem_limit_bytes=32 * 1024 * 1024,
        ),
    )(coefs, x2, y2)

    if num_parts == 1:
        return out[0, 0]
    return jnp.sum(out)


def _reference_loss(coefs, x, y):
    a, b, c, d = coefs[0], coefs[1], coefs[2], coefs[3]
    y_pred = a + b * x + c * x**2 + d * x**3
    return jnp.sum((y_pred - y) ** 2)


if __name__ == "__main__":
    key = jax.random.PRNGKey(0)
    ka, kb, kc, kd = jax.random.split(key, 4)

    # Deterministic "torch.randn(())" style scalar parameters.
    a = jax.random.normal(ka, (), dtype=jnp.float32)
    b = jax.random.normal(kb, (), dtype=jnp.float32)
    c = jax.random.normal(kc, (), dtype=jnp.float32)
    d = jax.random.normal(kd, (), dtype=jnp.float32)
    coefs = jnp.stack([a, b, c, d]).astype(jnp.float32)

    # 1) Toy size consistent with the original example (x over [-pi, pi],
    #    y = sin(x)); N = 2048 -> single grid step, single chunk.
    n = 2048
    x = jnp.linspace(-jnp.pi, jnp.pi, n, dtype=jnp.float32)
    y = jnp.sin(x)
    loss = jax.block_until_ready(polynomial3_loss(coefs, x, y))
    loss_ref = _reference_loss(coefs, x, y)
    assert jnp.allclose(loss, loss_ref, rtol=1e-4, atol=1e-2), (loss, loss_ref)

    # 2) Larger input, still one tile at the default cap.
    n2 = 16384
    x2 = jnp.linspace(-jnp.pi, jnp.pi, n2, dtype=jnp.float32)
    y2 = jnp.sin(x2)
    loss2 = jax.block_until_ready(polynomial3_loss(coefs, x2, y2))
    loss2_ref = _reference_loss(coefs, x2, y2)
    assert jnp.allclose(loss2, loss2_ref, rtol=1e-4, atol=1e-1), (loss2, loss2_ref)

    # 3) Awkward N (not a multiple of 1024) with small tile/chunk caps to
    #    exercise wrapper padding, the multi-step accumulator along the
    #    "arbitrary" reduction axis, and the in-kernel chunk fori_loop.
    n3 = 5000
    x3 = jnp.linspace(-jnp.pi, jnp.pi, n3, dtype=jnp.float32)
    y3 = jnp.sin(x3)
    loss3 = jax.block_until_ready(
        polynomial3_loss(coefs, x3, y3, max_tile_rows=16, chunk_rows=8))
    loss3_ref = _reference_loss(coefs, x3, y3)
    assert jnp.allclose(loss3, loss3_ref, rtol=1e-4, atol=1e-2), (loss3, loss3_ref)

    print("KERNEL_OK")
</pallas_src>

<mosaic_0001>
module attributes {stable_mosaic.version = 11 : i64} {
  func.func @kernel(%arg0: i32, %arg1: memref<4xf32, #tpu.memory_space<smem>>, %arg2: memref<16x128xf32, #tpu.memory_space<vmem>>, %arg3: memref<16x128xf32, #tpu.memory_space<vmem>>, %arg4: memref<1x1xf32, #tpu.memory_space<vmem>>, %arg5: memref<8x128xf32, #tpu.memory_space<vmem>>) attributes {dimension_semantics = [#tpu.dimension_semantics<arbitrary>], iteration_bounds = array<i64: 1>, scalar_prefetch = 0 : i64, scratch_operands = 1 : i64, tpu.core_type = #tpu.core_type<tc>, window_params = [{transform_indices = @transform_0, window_bounds = array<i64: 4>}, {transform_indices = @transform_1, window_bounds = array<i64: 16, 128>}, {transform_indices = @transform_2, window_bounds = array<i64: 16, 128>}, {pipeline_mode = #tpu.pipeline_mode<synchronous>, transform_indices = @transform_3, window_bounds = array<i64: 1, 1>}]} {
    %c0 = arith.constant 0 : index
    %0 = memref.load %arg1[%c0] : memref<4xf32, #tpu.memory_space<smem>>
    %c1 = arith.constant 1 : index
    %1 = memref.load %arg1[%c1] : memref<4xf32, #tpu.memory_space<smem>>
    %c2 = arith.constant 2 : index
    %2 = memref.load %arg1[%c2] : memref<4xf32, #tpu.memory_space<smem>>
    %c3 = arith.constant 3 : index
    %3 = memref.load %arg1[%c3] : memref<4xf32, #tpu.memory_space<smem>>
    %c0_i32 = arith.constant 0 : i32
    %4 = arith.cmpi eq, %arg0, %c0_i32 : i32
    %5 = arith.extui %4 : i1 to i32
    %c0_i32_0 = arith.constant 0 : i32
    %6 = arith.cmpi ne, %5, %c0_i32_0 : i32
    scf.if %6 {
      %cst_11 = arith.constant 0.000000e+00 : f32
      %29 = vector.broadcast %cst_11 : f32 to vector<8x128xf32>
      %c0_12 = arith.constant 0 : index
      %c0_13 = arith.constant 0 : index
      %30 = vector.load %arg5[%c0_12, %c0_13] : memref<8x128xf32, #tpu.memory_space<vmem>>, vector<8x128xf32>
      tpu.vector_store %arg5[%c0_12, %c0_13], %29 {strides = array<i32>} : memref<8x128xf32, #tpu.memory_space<vmem>>, vector<8x128xf32>,
    } else {
    }
    %c0_1 = arith.constant 0 : index
    %c0_2 = arith.constant 0 : index
    %7 = vector.load %arg2[%c0_1, %c0_2] : memref<16x128xf32, #tpu.memory_space<vmem>>, vector<16x128xf32>
    %c0_3 = arith.constant 0 : index
    %c0_4 = arith.constant 0 : index
    %8 = vector.load %arg3[%c0_3, %c0_4] : memref<16x128xf32, #tpu.memory_space<vmem>>, vector<16x128xf32>
    %9 = vector.broadcast %3 : f32 to vector<16x128xf32>
    %10 = arith.mulf %7, %9 : vector<16x128xf32>
    %11 = vector.broadcast %2 : f32 to vector<16x128xf32>
    %12 = arith.addf %11, %10 : vector<16x128xf32>
    %13 = arith.mulf %7, %12 : vector<16x128xf32>
    %14 = vector.broadcast %1 : f32 to vector<16x128xf32>
    %15 = arith.addf %14, %13 : vector<16x128xf32>
    %16 = arith.mulf %7, %15 : vector<16x128xf32>
    %17 = vector.broadcast %0 : f32 to vector<16x128xf32>
    %18 = arith.addf %17, %16 : vector<16x128xf32>
    %19 = arith.subf %18, %8 : vector<16x128xf32>
    %20 = arith.mulf %19, %19 : vector<16x128xf32>
    %21 = vector.shape_cast %20 : vector<16x128xf32> to vector<2x8x128xf32>
    %cst = arith.constant dense<0.000000e+00> : vector<8x128xf32>
    %22 = vector.multi_reduction <add>, %21, %cst [0] : vector<2x8x128xf32> to vector<8x128xf32>
    %c0_5 = arith.constant 0 : index
    %c0_6 = arith.constant 0 : index
    %23 = vector.load %arg5[%c0_5, %c0_6] : memref<8x128xf32, #tpu.memory_space<vmem>>, vector<8x128xf32>
    %24 = arith.addf %23, %22 : vector<8x128xf32>
    %c0_7 = arith.constant 0 : index
    %c0_8 = arith.constant 0 : index
    %25 = vector.load %arg5[%c0_7, %c0_8] : memref<8x128xf32, #tpu.memory_space<vmem>>, vector<8x128xf32>
    tpu.vector_store %arg5[%c0_7, %c0_8], %24 {strides = array<i32>} : memref<8x128xf32, #tpu.memory_space<vmem>>, vector<8x128xf32>,
    %c0_i32_9 = arith.constant 0 : i32
    %26 = arith.cmpi eq, %arg0, %c0_i32_9 : i32
    %27 = arith.extui %26 : i1 to i32
    %c0_i32_10 = arith.constant 0 : i32
    %28 = arith.cmpi ne, %27, %c0_i32_10 : i32
    scf.if %28 {
      %c0_11 = arith.constant 0 : index
      %c0_12 = arith.constant 0 : index
      %29 = vector.load %arg5[%c0_11, %c0_12] : memref<8x128xf32, #tpu.memory_space<vmem>>, vector<8x128xf32>
      %cst_13 = arith.constant dense<0.000000e+00> : vector<8xf32>
      %30 = vector.multi_reduction <add>, %29, %cst_13 [1] : vector<8x128xf32> to vector<8xf32>
      %31 = vector.shape_cast %30 : vector<8xf32> to vector<8x1xf32>
      %cst_14 = arith.constant dense<0.000000e+00> : vector<1xf32>
      %32 = vector.multi_reduction <add>, %31, %cst_14 [0] : vector<8x1xf32> to vector<1xf32>
      %33 = vector.shape_cast %32 : vector<1xf32> to vector<1x1xf32>
      %c0_15 = arith.constant 0 : index
      %c0_16 = arith.constant 0 : index
      %34 = vector.load %arg4[%c0_15, %c0_16] : memref<1x1xf32, #tpu.memory_space<vmem>>, vector<1x1xf32>
      tpu.vector_store %arg4[%c0_15, %c0_16], %33 {strides = array<i32>} : memref<1x1xf32, #tpu.memory_space<vmem>>, vector<1x1xf32>,
    } else {
    }
    return
  }
  func.func @transform_0(%arg0: i32) -> i32 {
    %c0_i32 = arith.constant 0 : i32
    %c0_i32_0 = arith.constant 0 : i32
    return %c0_i32 : i32
  }
  func.func @transform_1(%arg0: i32) -> (i32, i32) {
    %c0_i32 = arith.constant 0 : i32
    %c0_i32_0 = arith.constant 0 : i32
    return %arg0, %c0_i32 : i32, i32
  }
  func.func @transform_2(%arg0: i32) -> (i32, i32) {
    %c0_i32 = arith.constant 0 : i32
    %c0_i32_0 = arith.constant 0 : i32
    return %arg0, %c0_i32 : i32, i32
  }
  func.func @transform_3(%arg0: i32) -> (i32, i32) {
    %c0_i32 = arith.constant 0 : i32
    %c0_i32_0 = arith.constant 0 : i32
    %c0_i32_1 = arith.constant 0 : i32
    return %c0_i32, %c0_i32_0 : i32, i32
  }
}

</mosaic_0001>

<llo_original>
// kernel: tpu_custom_call.1
$region0: #{tpu_custom_call.1}
  #allocation0 [shape = 'u32[]', space=smem, size = 0x4, offset = 0x4, fixed_abs, tag = 'smem constant byte address 0x4 - core index']
  #allocation1 [shape = 'u32[144,128]{1,0:T(1,128)}', space=vmem, size = 0x12000, scoped, tag = 'internal scratch']
  #allocation2 [shape = 'f32[8,128]{1,0:T(8,128)}', space=vmem, size = 0x1000, scoped, tag = 'scratch operand']
  %s0 = inlined_call_operand.hbm [shape: f32[4], index: 0, kind: input, shape index: {}]
  %s1 = inlined_call_operand.hbm [shape: f32[16,128], index: 1, kind: input, shape index: {}]
  %s2 = inlined_call_operand.hbm [shape: f32[16,128], index: 2, kind: input, shape index: {}]
  %s3 = inlined_call_operand.hbm [shape: f32[1,1], index: 3, kind: output, shape index: {}]
  %s4 = sld [smem:[#allocation0]]
  $region42: #{tpu_custom_call.1} parent=0
    _
  %s6 = ssub.s32 1, %s4
  %s7 = scalar_select 0, %s6, %s4
  $region1: #{tpu_custom_call.1} parent=0
    #allocation3 [shape = 'u8[512]{0}', space=smem, size = 0x200, scoped, tag = 'input window, operand 0, single buffered']
    #allocation4 [shape = 's32[1]{0}', space=sflag, size = 0x4, scoped, tag = 'scoped memory for tpu_custom_call.1']
    #allocation5 [shape = 's32[1]{0}', space=sflag, size = 0x4, scoped, tag = 'scoped memory for tpu_custom_call.1']
    #allocation6 [shape = 's32[1]{0}', space=sflag, size = 0x4, scoped, tag = 'scoped memory for tpu_custom_call.1']
    #allocation7 [shape = 'u8[8192]{0}', space=vmem, size = 0x2000, scoped, tag = 'input window, operand 1, single buffered']
    #allocation8 [shape = 'u8[8192]{0}', space=vmem, size = 0x2000, scoped, tag = 'input window, operand 2, single buffered']
    #allocation9 [shape = 's32[1]{0}', space=sflag, size = 0x4, scoped, tag = 'scoped memory for tpu_custom_call.1']
    #allocation10 [shape = 'u8[512]{0}', space=vmem, size = 0x400, scoped, tag = 'output window, operand 0, single buffered']
    %8 = vsyncpa [#allocation6], 0
    %9 = vsyncpa [#allocation4], 0
    %10 = vsyncpa [#allocation9], 0
    %11 = vsyncpa [#allocation5], 0
    // Predicated region
    $region2: #{tpu_custom_call.1} parent=1 // pred_check
      _
    $region3: #{tpu_custom_call.1} parent=1 // pred_check_branch
      %13 = sbr.rel (0) target = $region5
    $region4: #{tpu_custom_call.1} parent=1 // pred_region
      %s15 = ssub.s32 16, 16
      %16 = vsyncadd [#allocation6], %s15
      %19 = dma.hbm_to_smem %s0, 16, [#allocation3], [#allocation6]
    $region5: #{tpu_custom_call.1} parent=1 // pred_fallthru
      _
    // Predicated region
    $region6: #{tpu_custom_call.1} parent=1 // pred_check
      _
    $region7: #{tpu_custom_call.1} parent=1 // pred_check_branch
      %21 = sbr.rel (0) target = $region9
    $region8: #{tpu_custom_call.1} parent=1 // pred_region
      %s23 = ssub.s32 256, 256
      %24 = vsyncadd [#allocation4], %s23
      %s25 = sshll.u32 [#allocation7], 4
      %s26 = int_to_ptr.vmem [resolvable:$true] %s25
      %31 = dma.hbm_to_vmem [thread:$0]  %s1, 256, %s26, [#allocation4], 128, 128, 8
    $region9: #{tpu_custom_call.1} parent=1 // pred_fallthru
      _
    // Predicated region
    $region10: #{tpu_custom_call.1} parent=1 // pred_check
      _
    $region11: #{tpu_custom_call.1} parent=1 // pred_check_branch
      %33 = sbr.rel (0) target = $region13
    $region12: #{tpu_custom_call.1} parent=1 // pred_region
      %s35 = ssub.s32 256, 256
      %36 = vsyncadd [#allocation9], %s35
      %s37 = sshll.u32 [#allocation8], 4
      %s38 = int_to_ptr.vmem [resolvable:$true] %s37
      %43 = dma.hbm_to_vmem [thread:$0]  %s2, 256, %s38, [#allocation9], 128, 128, 8
    $region13: #{tpu_custom_call.1} parent=1 // pred_fallthru
      _
    // Predicated region
    $region14: #{tpu_custom_call.1} parent=1 // pred_check
      _
    $region15: #{tpu_custom_call.1} parent=1 // pred_check_branch
      %45 = sbr.rel (0) target = $region17
    $region16: #{tpu_custom_call.1} parent=1 // pred_region
      %46 = dma.done [#allocation6], 16
    $region17: #{tpu_custom_call.1} parent=1 // pred_fallthru
      _
    // Predicated region
    $region18: #{tpu_custom_call.1} parent=1 // pred_check
      _
    $region19: #{tpu_custom_call.1} parent=1 // pred_check_branch
      %48 = sbr.rel (0) target = $region21
    $region20: #{tpu_custom_call.1} parent=1 // pred_region
      %49 = dma.done [#allocation4], 256
    $region21: #{tpu_custom_call.1} parent=1 // pred_fallthru
      _
    // Predicated region
    $region22: #{tpu_custom_call.1} parent=1 // pred_check
      _
    $region23: #{tpu_custom_call.1} parent=1 // pred_check_branch
      %51 = sbr.rel (0) target = $region25
    $region24: #{tpu_custom_call.1} parent=1 // pred_region
      %52 = dma.done [#allocation9], 256
    $region25: #{tpu_custom_call.1} parent=1 // pred_fallthru
      _
    %53 = sfence
    %s54 = sld [smem:[#allocation3]]
    %s55 = sld [smem:[#allocation3 + $0x1]]
    %s56 = sld [smem:[#allocation3 + $0x2]]
    %s57 = sld [smem:[#allocation3 + $0x3]]
    %p58 = scmp.eq.s32.totalorder 0, 0
    // Predicated region
    $region26: #{tpu_custom_call.1} parent=1 // pred_check
      %p59 = pneg %p58
    $region27: #{tpu_custom_call.1} parent=1 // pred_check_branch
      %61 = sbr.rel (%p59) target = $region29
    $region28: #{tpu_custom_call.1} parent=1 // pred_region
      %62 = vst [vmem:[#allocation2] sm:$0xff] 0.0
    $region29: #{tpu_custom_call.1} parent=1 // pred_fallthru
      _
    %v63 = vld [vmem:[#allocation7] sm:$0xff]
    %v64 = vld [vmem:[#allocation7 + $0x8] sm:$0xff]
    %v65 = vld [vmem:[#allocation8] sm:$0xff]
    %v66 = vld [vmem:[#allocation8 + $0x8] sm:$0xff]
    %v67 = vstv %s57
    %v68 = vmul.f32 %v63, %v67
    %v69 = vmul.f32 %v64, %v67
    %v70 = vstv %s56
    %v71 = vadd.f32 %v70, %v68
    %v72 = vadd.f32 %v70, %v69
    %v73 = vmul.f32 %v63, %v71
    %v74 = vmul.f32 %v64, %v72
    %v75 = vstv %s55
    %v76 = vadd.f32 %v75, %v73
    %v77 = vadd.f32 %v75, %v74
    %v78 = vmul.f32 %v63, %v76
    %v79 = vmul.f32 %v64, %v77
    %v80 = vstv %s54
    %v81 = vadd.f32 %v80, %v78
    %v82 = vadd.f32 %v80, %v79
    %v83 = vsub.f32 %v81, %v65
    %v84 = vsub.f32 %v82, %v66
    %v85 = vmul.f32 %v83, %v83
    %v86 = vmul.f32 %v84, %v84
    %v87 = vadd.f32 %v85, %v86
    %v88 = vld [vmem:[#allocation2] sm:$0xff]
    %v89 = vadd.f32 %v88, %v87
    %90 = vst [vmem:[#allocation2] sm:$0xff] %v89
    // Predicated region
    $region30: #{tpu_custom_call.1} parent=1 // pred_check
      %p91 = pneg %p58
    $region31: #{tpu_custom_call.1} parent=1 // pred_check_branch
      %93 = sbr.rel (%p91) target = $region33
    $region32: #{tpu_custom_call.1} parent=1 // pred_region
      %v94 = vld [vmem:[#allocation2] sm:$0xff]
      %95 = vadd.xlane.f32.xlu0 %v94
      %v96 = vpop.xlane.xlu0 %95
      %v97 = vrot.slane %v96, 4
      %v98 = vadd.f32 %v96, %v97
      %v99 = vrot.slane %v98, 2
      %v100 = vadd.f32 %v98, %v99
      %v101 = vrot.slane %v100, 1
      %v102 = vadd.f32 %v100, %v101
      %vm103 = vcmask 0
      %104 = vst.msk [vmem:[#allocation10] sm:$0x1] %vm103, %v102
    $region33: #{tpu_custom_call.1} parent=1 // pred_fallthru
      _
    // Predicated region
    $region34: #{tpu_custom_call.1} parent=1 // pred_check
      _
    $region35: #{tpu_custom_call.1} parent=1 // pred_check_branch
      %106 = sbr.rel (0) target = $region37
    $region36: #{tpu_custom_call.1} parent=1 // pred_region
      %s108 = ssub.s32 16, 16
      %109 = vsyncadd [#allocation5], %s108
      %s111 = sshll.u32 [#allocation10], 4
      %s112 = int_to_ptr.vmem [resolvable:$true] %s111
      %114 = dma.vmem_to_hbm [thread:$0]  %s112, 16, %s3, [#allocation5]
    $region37: #{tpu_custom_call.1} parent=1 // pred_fallthru
      _
    // Predicated region
    $region38: #{tpu_custom_call.1} parent=1 // pred_check
      _
    $region39: #{tpu_custom_call.1} parent=1 // pred_check_branch
      %116 = sbr.rel (0) target = $region41
    $region40: #{tpu_custom_call.1} parent=1 // pred_region
      %117 = dma.done [#allocation5], 16
    $region41: #{tpu_custom_call.1} parent=1 // pred_fallthru
      _
    %118 = vsyncpa [#allocation4], 1
    %119 = vsyncpa [#allocation9], 1
    %120 = vsyncpa [#allocation5], 1
    %121 = vsyncpa [#allocation6], 1

</llo_original>
